<compile_context>
chip_gen: v6e
topology: v6e:2x2x1
jax: 0.10.0
libtpu: 0.0.40
codegen_flags: <defaults>
</compile_context>

<pallas_src>
import jax
import jax.numpy as jnp
from jax.experimental import pallas as pl
from jax.experimental.pallas import tpu as pltpu


def _dma_identity_kernel(x_hbm, o_hbm, sem):
    # Identity forward of the base Encoder interface: one whole-array
    # HBM -> HBM DMA.  No VMEM staging, no TensorCore vector work.
    cp = pltpu.make_async_copy(x_hbm, o_hbm, sem)
    cp.start()
    cp.wait()


def _identity_dma_copy(x):
    """Whole-array HBM->HBM DMA copy (shape/dtype/layout agnostic)."""
    nbytes = x.size * x.dtype.itemsize
    return pl.pallas_call(
        _dma_identity_kernel,
        out_shape=jax.ShapeDtypeStruct(x.shape, x.dtype),
        in_specs=[pl.BlockSpec(memory_space=pl.ANY)],
        out_specs=pl.BlockSpec(memory_space=pl.ANY),
        scratch_shapes=[pltpu.SemaphoreType.DMA(())],
        cost_estimate=pl.CostEstimate(
            flops=0, transcendentals=0, bytes_accessed=2 * nbytes),
    )(x)


def encoder_forward(x, *args):
    """Pallas `Encoder.forward` stand-in (identity interface).

    x: (B, T, H) array.  Returns a new array of identical shape/dtype whose
    values equal the input.  Extra *args mirror the PyTorch signature and are
    ignored (the base class defines no use for them).

    Note: the cheapest correct implementation of this abstract interface is to
    return `x` directly; the single-DMA kernel below exists only to provide a
    concrete Pallas kernel for interface parity, and is the minimal-cost way
    to do so (one DMA-engine transfer, no VMEM staging, no TC vector work).
    """
    return _identity_dma_copy(x)


if __name__ == "__main__":
    key = jax.random.PRNGKey(0)
    # Small shapes consistent with a seq2seq encoder input: batch=2, seq=8, hidden=32.
    B, T, H = 2, 8, 32
    x = jax.random.normal(key, (B, T, H), dtype=jnp.float32)

    out = encoder_forward(x)
    out = jax.block_until_ready(out)

    # Sanity check: identity interface must return the input unchanged.
    # (No aliasing/donation is used, so `x` is still valid to read here.)
    assert out.shape == x.shape and out.dtype == x.dtype
    assert bool(jnp.allclose(out, x))

    print("KERNEL_OK")
</pallas_src>

<mosaic_0001>
module attributes {stable_mosaic.version = 11 : i64} {
  func.func @_dma_identity_kernel(%arg0: memref<2x8x32xf32, #tpu.memory_space<any>>, %arg1: memref<2x8x32xf32, #tpu.memory_space<any>>, %arg2: memref<!tpu.dma_semaphore, #tpu.memory_space<semaphore_mem>>) attributes {dimension_semantics = [], scalar_prefetch = 0 : i64, scratch_operands = 1 : i64, tpu.core_type = #tpu.core_type<tc>} {
    tpu.enqueue_dma source(%arg0 : memref<2x8x32xf32, #tpu.memory_space<any>>) target(%arg1 : memref<2x8x32xf32, #tpu.memory_space<any>>) target_semaphore(%arg2 : memref<!tpu.dma_semaphore, #tpu.memory_space<semaphore_mem>>)
    tpu.wait_dma2 semaphore(%arg2 : memref<!tpu.dma_semaphore, #tpu.memory_space<semaphore_mem>>) src(%arg0 : memref<2x8x32xf32, #tpu.memory_space<any>>) dst(%arg1 : memref<2x8x32xf32, #tpu.memory_space<any>>)
    return
  }
}

</mosaic_0001>

<llo_original>
// kernel: tpu_custom_call.1
$region0: #{tpu_custom_call.1}
  #allocation0 [shape = 'u32[]', space=smem, size = 0x4, offset = 0x4, fixed_abs, tag = 'smem constant byte address 0x4 - core index']
  #allocation1 [shape = 'u32[144,128]{1,0:T(1,128)}', space=vmem, size = 0x12000, scoped, tag = 'internal scratch']
  #allocation2 [shape = 's32[1]{0}', space=sflag, size = 0x4, scoped, tag = 'scratch operand']
  #allocation3 [shape = 's32[]', space=sflag, size = 0x4, offset = 0, fixed_abs, tag = 'sflag constant byte address 0x0 - dummy sync flag']
  #allocation4 [shape = 'u32[0]{0}', space=smem, size = 0, offset = 0, fixed_abs, tag = 'smem constant byte address 0x0 - null']
  %s0 = inlined_call_operand.hbm [shape: f32[2,8,32], index: 0, kind: input, shape index: {}]
  %s1 = inlined_call_operand.hbm [shape: f32[2,8,32], index: 1, kind: output, shape index: {}]
  %s2 = sld [smem:[#allocation0]]
  $region2: #{tpu_custom_call.1} parent=0
    _
  %s4 = ssub.s32 1, %s2
  %s5 = scalar_select 0, %s4, %s2
  %s7 = sshll.u32 1, 14
  %s8 = sxor.u32 4294967295, %s7
  %12 = dma.general %s0, 256, %s1, [#allocation2], 131072, [#allocation4], 0, 0
  %s13 = smul.u32 2, 8
  %s14 = smul.u32 %s13, 1
  %s15 = sshll.u32 %s14, 4
  %16 = dma.done [#allocation2], %s15
  %17 = vsyncmov [#allocation2]
  %s18 = vpop.sfrf %17
  %p19 = scmp.eq.s32.totalorder %s18, 0
  %p20 = pneg %p19
  %22 = shalt.err (%p20)

</llo_original>
